<compile_context>
chip_gen: v7x
topology: tpu7x:2x2x1
jax: 0.10.0
libtpu: 0.0.40
codegen_flags: <defaults>
</compile_context>

<pallas_src>
import functools

import jax
import jax.numpy as jnp
from jax import lax
from jax.experimental import pallas as pl
from jax.experimental.pallas import tpu as pltpu


# ----------------------------- Pallas kernels ------------------------------

def _block_mask_kernel(pm_ref, bm_ref, *, block_size):
    """pm_ref: (1, H+2p, W+2p) zero-padded seed mask.  bm_ref: (1, H, W).

    Separable stride-1 max pool (k row shifts, then k column shifts) followed
    by block_mask = 1 - pooled.  Zero padding is equivalent to PyTorch's -inf
    max-pool padding because the seed mask is non-negative, and emitting only
    H x W outputs reproduces the even-block-size [:-1, :-1] trim.
    """
    h = bm_ref.shape[1]
    w = bm_ref.shape[2]
    pm = pm_ref[0]                        # (H+2p, W+2p)

    rows = pm[0:h, :]
    for dh in range(1, block_size):       # k static row shifts (sublane)
        rows = jnp.maximum(rows, pm[dh:dh + h, :])

    pooled = rows[:, 0:w]
    for dw in range(1, block_size):       # k static column shifts (lane)
        pooled = jnp.maximum(pooled, rows[:, dw:dw + w])

    bm_ref[0] = 1.0 - pooled


def _apply_block_mask_kernel(x_ref, m_ref, s_ref, o_ref):
    """x_ref: (1, 1, TH, W)   m_ref: (1, TH, W)   s_ref: (1, 1)   o_ref like x.

    out = x * block_mask * (numel / sum).  The mask tile is broadcast across
    the channel grid axis via its index_map, the scale is a VMEM-resident
    (1, 1) constant block.
    """
    o_ref[0, 0] = x_ref[0, 0] * (m_ref[0] * s_ref[0, 0])


# ------------------------------- wrapper ------------------------------------

def _sample_seed_mask(key, n, h, w, gamma, dtype):
    # TODO(synk): torch.rand's host RNG stream cannot be reproduced; jax.random
    # gives the same Bernoulli(gamma) distribution with a different stream.
    return (jax.random.uniform(key, (n, h, w)) < gamma).astype(dtype)


def _pick_tile_h(h, w, max_block_elems=512 * 1024):
    """Largest 8-aligned divisor of H (or full H) whose (tile, W) block keeps
    the double-buffered x/mask/out working set (~24 * tile * W bytes) well
    inside v7x's 32 MiB scoped-VMEM default."""
    if h * w <= max_block_elems:
        return h
    cap = max(8, (max_block_elems // max(w, 1)) // 8 * 8)
    t = min(cap, (h // 8) * 8)
    while t >= 8:
        if h % t == 0:
            return t
        t -= 8
    return h  # no 8-aligned divisor: fall back to full rows


def dropblock2d_forward(x, key, *, drop_prob, block_size, training=True):
    """Matches DropBlock2D.forward(x) for x of shape (N, C, H, W)."""
    assert x.ndim == 4, "Expected input with 4 dimensions (N, C, H, W)"
    if not training or drop_prob == 0.0:
        return x

    n, c, h, w = x.shape
    k = block_size
    p = k // 2
    gamma = drop_prob / (k ** 2)

    # Bernoulli seed mask (N, H, W), zero-padded for the stride-1 max pool.
    seed_mask = _sample_seed_mask(key, n, h, w, gamma, x.dtype)
    padded = jnp.pad(seed_mask, ((0, 0), (p, p), (p, p)))
    hp, wp = h + 2 * p, w + 2 * p

    # Kernel 1: block_mask = 1 - maxpool_k(seed_mask)    -> (N, H, W)
    block_mask = pl.pallas_call(
        functools.partial(_block_mask_kernel, block_size=k),
        out_shape=jax.ShapeDtypeStruct((n, h, w), x.dtype),
        grid=(n,),
        in_specs=[pl.BlockSpec((1, hp, wp), lambda i: (i, 0, 0))],
        out_specs=pl.BlockSpec((1, h, w), lambda i: (i, 0, 0)),
        compiler_params=pltpu.CompilerParams(dimension_semantics=("parallel",)),
    )(padded)

    # Global normalization factor numel / sum (f32 accumulation, tiny array).
    total = jnp.sum(block_mask.astype(jnp.float32))
    scale = (jnp.float32(block_mask.size) / total).astype(x.dtype).reshape(1, 1)

    # Kernel 2: out = x * block_mask[:, None] * scale, tiled over (N, H, C).
    tile_h = _pick_tile_h(h, w)
    grid = (n, h // tile_h, c)
    out = pl.pallas_call(
        _apply_block_mask_kernel,
        out_shape=jax.ShapeDtypeStruct(x.shape, x.dtype),
        grid=grid,
        in_specs=[
            # x: one (tile_h, W) spatial slab of one channel per step
            pl.BlockSpec((1, 1, tile_h, w), lambda i, t, j: (i, j, t, 0)),
            # mask: same spatial slab, index_map ignores the channel axis so
            # the tile is revisited (stays VMEM-resident) across channels
            pl.BlockSpec((1, tile_h, w), lambda i, t, j: (i, t, 0)),
            # scalar normalization factor: constant block, loaded once
            pl.BlockSpec((1, 1), lambda i, t, j: (0, 0)),
        ],
        out_specs=pl.BlockSpec((1, 1, tile_h, w), lambda i, t, j: (i, j, t, 0)),
        compiler_params=pltpu.CompilerParams(
            dimension_semantics=("parallel", "parallel", "arbitrary")),
    )(x, block_mask, scale)
    return out


# ------------------------------ pure-JAX ref ---------------------------------

def _ref_dropblock2d(x, key, drop_prob, block_size, training=True):
    if not training or drop_prob == 0.0:
        return x
    n, c, h, w = x.shape
    k = block_size
    p = k // 2
    gamma = drop_prob / (k ** 2)
    mask = _sample_seed_mask(key, n, h, w, gamma, x.dtype)
    pooled = lax.reduce_window(mask, jnp.zeros((), mask.dtype), lax.max,
                               window_dimensions=(1, k, k),
                               window_strides=(1, 1, 1),
                               padding=[(0, 0), (p, p), (p, p)])
    if k % 2 == 0:
        pooled = pooled[:, :h, :w]
    block_mask = 1.0 - pooled
    out = x * block_mask[:, None, :, :]
    return out * (block_mask.size / jnp.sum(block_mask))


# ---------------------------------- main -------------------------------------

if __name__ == "__main__":
    N, C, H, W = 2, 4, 16, 16
    key = jax.random.PRNGKey(0)
    k_x, k_m1, k_m2 = jax.random.split(key, 3)
    x = jax.random.normal(k_x, (N, C, H, W), jnp.float32)

    # odd and even block sizes exercise both max-pool padding/trim paths
    for drop_prob, block_size, k_m in ((0.2, 3, k_m1), (0.3, 4, k_m2)):
        fwd = jax.jit(functools.partial(dropblock2d_forward,
                                        drop_prob=drop_prob,
                                        block_size=block_size,
                                        training=True))
        out = jax.block_until_ready(fwd(x, k_m))
        ref = _ref_dropblock2d(x, k_m, drop_prob, block_size, training=True)
        assert out.shape == x.shape
        err = float(jnp.max(jnp.abs(out - ref)))
        assert jnp.allclose(out, ref, rtol=1e-5, atol=1e-5), err

    # eval mode / drop_prob == 0 is the identity
    out_eval = dropblock2d_forward(x, k_m1, drop_prob=0.2, block_size=3,
                                   training=False)
    assert jnp.array_equal(out_eval, x)

    print("KERNEL_OK")
</pallas_src>

<mosaic_0001>
module attributes {stable_mosaic.version = 11 : i64} {
  func.func @_block_mask_kernel(%arg0: i32, %arg1: memref<1x18x18xf32, #tpu.memory_space<vmem>>, %arg2: memref<1x16x16xf32, #tpu.memory_space<vmem>>) attributes {dimension_semantics = [#tpu.dimension_semantics<parallel>], iteration_bounds = array<i64: 2>, scalar_prefetch = 0 : i64, scratch_operands = 0 : i64, tpu.core_type = #tpu.core_type<tc>, window_params = [{transform_indices = @transform_0, window_bounds = array<i64: 1, 18, 18>}, {transform_indices = @transform_1, window_bounds = array<i64: 1, 16, 16>}]} {
    %c0 = arith.constant 0 : index
    %c0_0 = arith.constant 0 : index
    %c0_1 = arith.constant 0 : index
    %0 = vector.load %arg1[%c0, %c0_0, %c0_1] : memref<1x18x18xf32, #tpu.memory_space<vmem>>, vector<1x18x18xf32>
    %1 = vector.shape_cast %0 : vector<1x18x18xf32> to vector<18x18xf32>
    %2 = vector.extract_strided_slice %1 {offsets = [0, 0], sizes = [16, 18], strides = [1, 1]} : vector<18x18xf32> to vector<16x18xf32>
    %3 = vector.extract_strided_slice %1 {offsets = [1, 0], sizes = [16, 18], strides = [1, 1]} : vector<18x18xf32> to vector<16x18xf32>
    %4 = arith.maximumf %2, %3 : vector<16x18xf32>
    %5 = vector.extract_strided_slice %1 {offsets = [2, 0], sizes = [16, 18], strides = [1, 1]} : vector<18x18xf32> to vector<16x18xf32>
    %6 = arith.maximumf %4, %5 : vector<16x18xf32>
    %7 = vector.extract_strided_slice %6 {offsets = [0, 0], sizes = [16, 16], strides = [1, 1]} : vector<16x18xf32> to vector<16x16xf32>
    %8 = vector.extract_strided_slice %6 {offsets = [0, 1], sizes = [16, 16], strides = [1, 1]} : vector<16x18xf32> to vector<16x16xf32>
    %9 = arith.maximumf %7, %8 : vector<16x16xf32>
    %10 = vector.extract_strided_slice %6 {offsets = [0, 2], sizes = [16, 16], strides = [1, 1]} : vector<16x18xf32> to vector<16x16xf32>
    %11 = arith.maximumf %9, %10 : vector<16x16xf32>
    %cst = arith.constant 1.000000e+00 : f32
    %12 = vector.broadcast %cst : f32 to vector<16x16xf32>
    %13 = arith.subf %12, %11 : vector<16x16xf32>
    %c0_2 = arith.constant 0 : index
    %c0_3 = arith.constant 0 : index
    %c0_4 = arith.constant 0 : index
    %14 = vector.load %arg2[%c0_2, %c0_3, %c0_4] : memref<1x16x16xf32, #tpu.memory_space<vmem>>, vector<1x16x16xf32>
    %15 = vector.shape_cast %14 : vector<1x16x16xf32> to vector<16x16xf32>
    %16 = vector.shape_cast %13 : vector<16x16xf32> to vector<1x16x16xf32>
    tpu.vector_store %arg2[%c0_2, %c0_3, %c0_4], %16 {strides = array<i32>} : memref<1x16x16xf32, #tpu.memory_space<vmem>>, vector<1x16x16xf32>,
    return
  }
  func.func @transform_0(%arg0: i32) -> (i32, i32, i32) {
    %c0_i32 = arith.constant 0 : i32
    %c0_i32_0 = arith.constant 0 : i32
    %c0_i32_1 = arith.constant 0 : i32
    return %arg0, %c0_i32, %c0_i32_0 : i32, i32, i32
  }
  func.func @transform_1(%arg0: i32) -> (i32, i32, i32) {
    %c0_i32 = arith.constant 0 : i32
    %c0_i32_0 = arith.constant 0 : i32
    %c0_i32_1 = arith.constant 0 : i32
    return %arg0, %c0_i32, %c0_i32_0 : i32, i32, i32
  }
}

module attributes {stable_mosaic.version = 11 : i64} {
  func.func @_apply_block_mask_kernel(%arg0: i32, %arg1: i32, %arg2: i32, %arg3: memref<1x1x16x16xf32, #tpu.memory_space<vmem>>, %arg4: memref<1x16x16xf32, #tpu.memory_space<vmem>>, %arg5: memref<1x1xf32, #tpu.memory_space<vmem>>, %arg6: memref<1x1x16x16xf32, #tpu.memory_space<vmem>>) attributes {dimension_semantics = [#tpu.dimension_semantics<parallel>, #tpu.dimension_semantics<parallel>, #tpu.dimension_semantics<arbitrary>], iteration_bounds = array<i64: 2, 1, 4>, scalar_prefetch = 0 : i64, scratch_operands = 0 : i64, tpu.core_type = #tpu.core_type<tc>, window_params = [{transform_indices = @transform_0, window_bounds = array<i64: 1, 1, 16, 16>}, {transform_indices = @transform_1, window_bounds = array<i64: 1, 16, 16>}, {pipeline_mode = #tpu.pipeline_mode<synchronous>, transform_indices = @transform_2, window_bounds = array<i64: 1, 1>}, {transform_indices = @transform_3, window_bounds = array<i64: 1, 1, 16, 16>}]} {
    %c0 = arith.constant 0 : index
    %c0_0 = arith.constant 0 : index
    %c0_1 = arith.constant 0 : index
    %c0_2 = arith.constant 0 : index
    %0 = vector.load %arg3[%c0, %c0_0, %c0_1, %c0_2] : memref<1x1x16x16xf32, #tpu.memory_space<vmem>>, vector<1x1x16x16xf32>
    %1 = vector.shape_cast %0 : vector<1x1x16x16xf32> to vector<16x16xf32>
    %c0_3 = arith.constant 0 : index
    %c0_4 = arith.constant 0 : index
    %c0_5 = arith.constant 0 : index
    %2 = vector.load %arg4[%c0_3, %c0_4, %c0_5] : memref<1x16x16xf32, #tpu.memory_space<vmem>>, vector<1x16x16xf32>
    %3 = vector.shape_cast %2 : vector<1x16x16xf32> to vector<16x16xf32>
    %c0_6 = arith.constant 0 : index
    %c0_7 = arith.constant 0 : index
    %4 = vector.load %arg5[%c0_6, %c0_7] : memref<1x1xf32, #tpu.memory_space<vmem>>, vector<1x1xf32>
    %5 = vector.extract %4[0, 0] : f32 from vector<1x1xf32>
    %6 = vector.broadcast %5 : f32 to vector<16x16xf32>
    %7 = arith.mulf %3, %6 : vector<16x16xf32>
    %8 = arith.mulf %1, %7 : vector<16x16xf32>
    %c0_8 = arith.constant 0 : index
    %c0_9 = arith.constant 0 : index
    %c0_10 = arith.constant 0 : index
    %c0_11 = arith.constant 0 : index
    %9 = vector.load %arg6[%c0_8, %c0_9, %c0_10, %c0_11] : memref<1x1x16x16xf32, #tpu.memory_space<vmem>>, vector<1x1x16x16xf32>
    %10 = vector.shape_cast %9 : vector<1x1x16x16xf32> to vector<16x16xf32>
    %11 = vector.shape_cast %8 : vector<16x16xf32> to vector<1x1x16x16xf32>
    tpu.vector_store %arg6[%c0_8, %c0_9, %c0_10, %c0_11], %11 {strides = array<i32>} : memref<1x1x16x16xf32, #tpu.memory_space<vmem>>, vector<1x1x16x16xf32>,
    return
  }
  func.func @transform_0(%arg0: i32, %arg1: i32, %arg2: i32) -> (i32, i32, i32, i32) {
    %c0_i32 = arith.constant 0 : i32
    %c0_i32_0 = arith.constant 0 : i32
    return %arg0, %arg2, %arg1, %c0_i32 : i32, i32, i32, i32
  }
  func.func @transform_1(%arg0: i32, %arg1: i32, %arg2: i32) -> (i32, i32, i32) {
    %c0_i32 = arith.constant 0 : i32
    %c0_i32_0 = arith.constant 0 : i32
    return %arg0, %arg1, %c0_i32 : i32, i32, i32
  }
  func.func @transform_2(%arg0: i32, %arg1: i32, %arg2: i32) -> (i32, i32) {
    %c0_i32 = arith.constant 0 : i32
    %c0_i32_0 = arith.constant 0 : i32
    %c0_i32_1 = arith.constant 0 : i32
    return %c0_i32, %c0_i32_0 : i32, i32
  }
  func.func @transform_3(%arg0: i32, %arg1: i32, %arg2: i32) -> (i32, i32, i32, i32) {
    %c0_i32 = arith.constant 0 : i32
    %c0_i32_0 = arith.constant 0 : i32
    return %arg0, %arg2, %arg1, %c0_i32 : i32, i32, i32, i32
  }
}

</mosaic_0001>

<llo_original>
// kernel: dropblock2d_forward.2
$region0: #{dropblock2d_forward.2}
  #allocation0 [shape = 'u32[]', space=smem, size = 0x4, offset = 0x4, fixed_abs, tag = 'smem constant byte address 0x4 - core index']
  #allocation1 [shape = 'u32[144,128]{1,0:T(1,128)}', space=vmem, size = 0x12000, scoped, tag = 'internal scratch']
  %s0 = inlined_call_operand.vmem [shape: f32[2,18,18], index: 0, kind: input, shape index: {}]
  %s1 = inlined_call_operand.vmem [shape: f32[2,16,16], index: 1, kind: output, shape index: {}]
  %s2 = sld [smem:[#allocation0]]
  $region37: #{dropblock2d_forward.2} parent=0
    _
  %s4 = ssub.s32 1, %s2
  %s5 = scalar_select 0, %s4, %s2
  loop: start=0, step=1, limit=4
  $region2: #{dropblock2d_forward.2} parent=0 // loop_pre_header
    _
  $region3: #{dropblock2d_forward.2} parent=0 // loop_header
    %s7 = sphi 0, %s11
    %p8 = scmp.ge.s32.totalorder %s7, 4
    %s17 = sphi 0, %s19
    %s20 = sphi 0, %s17
    %s21 = sphi 0, %s20
    %s37 = sphi 0, %s21
    %s43 = sphi 0, %s45
    %s46 = sphi 0, %s43
    %s47 = sphi 0, %s46
    %s63 = sphi 0, %s47
  $region4: #{dropblock2d_forward.2} parent=0 // loop_header_branch
    %10 = sbr.rel (%p8) target = $region8
  $region5: #{dropblock2d_forward.2} parent=0 // loop_body
    %s12 = ssub.s32 %s7, 1
    %s13 = ssub.s32 %s7, 2
    %s14 = sadd.s32 %s7, 1
    %s15 = ssub.s32 %s7, %s14
    %p16 = scmp.eq.s32.totalorder %s15, 0
    %s18 = sadd.s32 %s17, 1
    %s19 = scalar_select %p16, %s17, %s18
    %p22 = pneg %p16
    %p23 = scmp.eq.s32.totalorder %s7, 1
    %p24 = por %p22, %p23
    %p25 = scmp.ne.s32.totalorder %s17, %s20
    %p26 = scmp.eq.s32.totalorder %s7, 0
    %p27 = por %p25, %p26
    %p28 = scmp.ne.s32.totalorder %s17, %s20
    %p29 = scmp.eq.s32.totalorder %s12, 1
    %p30 = por %p28, %p29
    %p31 = scmp.ne.s32.totalorder %s20, %s21
    %p32 = scmp.eq.s32.totalorder %s12, 0
    %p33 = por %p31, %p32
    %p34 = scmp.ne.s32.totalorder %s20, %s21
    %p35 = scmp.eq.s32.totalorder %s13, 1
    %p36 = por %p34, %p35
    %p38 = scmp.ne.s32.totalorder %s21, %s37
    %p39 = scmp.eq.s32.totalorder %s13, 0
    %p40 = por %p38, %p39
    %s41 = ssub.s32 %s7, %s14
    %p42 = scmp.eq.s32.totalorder %s41, 0
    %s44 = sadd.s32 %s43, 1
    %s45 = scalar_select %p42, %s43, %s44
    %p48 = pneg %p42
    %p49 = scmp.eq.s32.totalorder %s7, 1
    %p50 = por %p48, %p49
    %p51 = scmp.ne.s32.totalorder %s43, %s46
    %p52 = scmp.eq.s32.totalorder %s7, 0
    %p53 = por %p51, %p52
    %p54 = scmp.ne.s32.totalorder %s43, %s46
    %p55 = scmp.eq.s32.totalorder %s12, 1
    %p56 = por %p54, %p55
    %p57 = scmp.ne.s32.totalorder %s46, %s47
    %p58 = scmp.eq.s32.totalorder %s12, 0
    %p59 = por %p57, %p58
    %p60 = scmp.ne.s32.totalorder %s46, %s47
    %p61 = scmp.eq.s32.totalorder %s13, 1
    %p62 = por %p60, %p61
    %p64 = scmp.ne.s32.totalorder %s47, %s63
    %p65 = scmp.eq.s32.totalorder %s13, 0
    %p66 = por %p64, %p65
    %p67 = scmp.le.s32.totalorder 1, %s7
    %p68 = scmp.lt.s32.totalorder %s7, 3
    %p69 = pnand %p67, %p68
    %p70 = pneg %p69
    // Predicated region
    $region9: #{dropblock2d_forward.2} parent=5 // pred_check
      _
    $region10: #{dropblock2d_forward.2} parent=5 // pred_check_branch
      %72 = sbr.rel (%p69) target = $region12
    $region11: #{dropblock2d_forward.2} parent=5 // pred_region
      %s73 = ssub.s32 %s7, 1
    $region12: #{dropblock2d_forward.2} parent=5 // pred_fallthru
      _
    %p74 = scmp.lt.s32.totalorder %s7, 2
    // Predicated region
    $region13: #{dropblock2d_forward.2} parent=5 // pred_check
      %p75 = pneg %p74
    $region14: #{dropblock2d_forward.2} parent=5 // pred_check_branch
      %77 = sbr.rel (%p75) target = $region16
    $region15: #{dropblock2d_forward.2} parent=5 // pred_region
      // Predicated region
      $region17: #{dropblock2d_forward.2} parent=15 // pred_check
        %p78 = pneg %p27
      $region18: #{dropblock2d_forward.2} parent=15 // pred_check_branch
        %80 = sbr.rel (%p78) target = $region20
      $region19: #{dropblock2d_forward.2} parent=15 // pred_region
        %p81 = scmp.lt.s32.totalorder %s7, 1
        %s82 = scalar_select %p81, %s7, 1
        %s83 = smul.addr %s82, 3
        %s84 = smul.addr %s83, 8
        %s85 = scalar_lea.vmem %s0, %s84
      $region20: #{dropblock2d_forward.2} parent=15 // pred_fallthru
        _
    $region16: #{dropblock2d_forward.2} parent=5 // pred_fallthru
      _
    %p86 = scmp.le.s32.totalorder 1, %s7
    %p87 = scmp.lt.s32.totalorder %s7, 3
    %p88 = pnand %p86, %p87
    %p89 = pneg %p88
    // Predicated region
    $region21: #{dropblock2d_forward.2} parent=5 // pred_check
      _
    $region22: #{dropblock2d_forward.2} parent=5 // pred_check_branch
      %91 = sbr.rel (%p88) target = $region24
    $region23: #{dropblock2d_forward.2} parent=5 // pred_region
      %s92 = ssub.s32 %s7, 1
      %p93 = scmp.lt.s32.totalorder %s12, 1
      %s94 = scalar_select %p93, %s12, 1
      %s95 = smul.addr %s94, 3
      %s96 = smul.addr %s95, 8
      %s97 = scalar_lea.vmem %s0, %s96
      %p98 = pneg %p33
      %p99 = pneg %p30
      %p100 = pneg %p59
      %p101 = pneg %p56
      %p102 = scmp.lt.s32.totalorder %s12, 1
      %s103 = scalar_select %p102, %s12, 1
      %s104 = smul.addr %s103, 2
      %s105 = smul.addr %s104, 8
      %s106 = scalar_lea.vmem %s1, %s105
      %p107 = scmp.lt.s32.totalorder %s12, 1
      %s108 = scalar_select %p107, %s12, 1
      %s109 = smul.addr %s108, 3
      %s110 = smul.addr %s109, 8
      %s111 = scalar_lea.vmem %s0, %s110
      %p112 = scmp.lt.s32.totalorder %s12, 1
      %s113 = scalar_select %p112, %s12, 1
      %s114 = smul.addr %s113, 2
      %s115 = smul.addr %s114, 8
      %s116 = scalar_lea.vmem %s1, %s115
      %v117 = vld [vmem:[%s111] sm:$0xff]
      %v118 = vld [vmem:[%s111 + $0x8] sm:$0xff]
      %v119 = vld [vmem:[%s111 + $0x10] sm:$0x3]
      %vm123 = vcmask 1046528
      %v124 = vrot.slane %v117, 1
      %v125 = vrot.slane %v118, 1
      %v126 = vsel %vm123, %v124, %v125
      %v127 = vrot.slane %v119, 1
      %v128 = vsel %vm123, %v125, %v127
      %v131 = vmax.f32 %v117, %v126
      %v132 = vmax.f32 %v118, %v128
      %vm133 = vcmask 1045504
      %v134 = vrot.slane %v117, 2
      %v135 = vrot.slane %v118, 2
      %v136 = vsel %vm133, %v134, %v135
      %v137 = vrot.slane %v119, 2
      %v138 = vsel %vm133, %v135, %v137
      %v141 = vmax.f32 %v131, %v136
      %v142 = vmax.f32 %v132, %v138
      %145 = vrot.lane.b32.xlu0 %v141, 127
      %v146 = vpop.permute.xlu0 %145
      %147 = vrot.lane.b32.xlu0 %v142, 127
      %v148 = vpop.permute.xlu0 %147
      %v151 = vmax.f32 %v141, %v146
      %v152 = vmax.f32 %v142, %v148
      %153 = vrot.lane.b32.xlu0 %v141, 126
      %v154 = vpop.permute.xlu0 %153
      %155 = vrot.lane.b32.xlu0 %v142, 126
      %v156 = vpop.permute.xlu0 %155
      %v159 = vmax.f32 %v151, %v154
      %v160 = vmax.f32 %v152, %v156
      %v161 = vsub.f32 1.0, %v159
      %v162 = vsub.f32 1.0, %v160
      %vm163 = vcmask 130048
      %164 = vst.msk [vmem:[%s116] sm:$0xff] %vm163, %v161
      %165 = vst.msk [vmem:[%s116 + $0x8] sm:$0xff] %vm163, %v162
      %p166 = scmp.lt.s32.totalorder %s12, 1
      %s167 = scalar_select %p166, %s12, 1
      %s168 = smul.addr %s167, 2
      %s169 = smul.addr %s168, 8
      %s170 = scalar_lea.vmem %s1, %s169
      // Predicated region
      $region25: #{dropblock2d_forward.2} parent=23 // pred_check
        %p171 = pneg %p56
      $region26: #{dropblock2d_forward.2} parent=23 // pred_check_branch
        %173 = sbr.rel (%p171) target = $region28
      $region27: #{dropblock2d_forward.2} parent=23 // pred_region
        _
      $region28: #{dropblock2d_forward.2} parent=23 // pred_fallthru
        _
    $region24: #{dropblock2d_forward.2} parent=5 // pred_fallthru
      _
    %p174 = scmp.le.s32.totalorder 2, %s7
    // Predicated region
    $region29: #{dropblock2d_forward.2} parent=5 // pred_check
      %p175 = pneg %p174
    $region30: #{dropblock2d_forward.2} parent=5 // pred_check_branch
      %177 = sbr.rel (%p175) target = $region32
    $region31: #{dropblock2d_forward.2} parent=5 // pred_region
      %s178 = ssub.s32 %s7, 2
      // Predicated region
      $region33: #{dropblock2d_forward.2} parent=31 // pred_check
        %p179 = pneg %p62
      $region34: #{dropblock2d_forward.2} parent=31 // pred_check_branch
        %181 = sbr.rel (%p179) target = $region36
      $region35: #{dropblock2d_forward.2} parent=31 // pred_region
        %p182 = scmp.lt.s32.totalorder %s13, 1
        %s183 = scalar_select %p182, %s13, 1
        %s184 = smul.addr %s183, 2
        %s185 = smul.addr %s184, 8
        %s186 = scalar_lea.vmem %s1, %s185
      $region36: #{dropblock2d_forward.2} parent=31 // pred_fallthru
        _
    $region32: #{dropblock2d_forward.2} parent=5 // pred_fallthru
      _
  $region6: #{dropblock2d_forward.2} parent=0 // loop_footer
    %s11 = sadd.s32 1, %s7
  $region7: #{dropblock2d_forward.2} parent=0 // loop_footer_branch
    %6 = sbr.rel target = $region3
  $region8: #{dropblock2d_forward.2} parent=0 // loop_exit
    _

// kernel: dropblock2d_forward.3
$region0: #{dropblock2d_forward.3}
  #allocation0 [shape = 'u32[]', space=smem, size = 0x4, offset = 0x4, fixed_abs, tag = 'smem constant byte address 0x4 - core index']
  #allocation1 [shape = 'u32[144,128]{1,0:T(1,128)}', space=vmem, size = 0x12000, scoped, tag = 'internal scratch']
  #allocation2 [shape = 'f32[1,1]{1,0:T(1,128)S(1)}', space=vmem, size = 0x200, scoped, tag = 'scoped memory for dropblock2d_forward.3']
  %s0 = inlined_call_operand.vmem [shape: f32[2,4,16,16], index: 0, kind: input, shape index: {}]
  %s1 = inlined_call_operand.vmem [shape: f32[2,16,16], index: 1, kind: input, shape index: {}]
  %s2 = inlined_call_operand.<no memory space> [shape: f32[1,1], index: 2, kind: input, shape index: {}]
  %s3 = inlined_call_operand.hbm [shape: f32[2,4,16,16], index: 3, kind: output, shape index: {}]
  %s4 = sld [smem:[#allocation0]]
  $region45: #{dropblock2d_forward.3} parent=0
    _
  %s6 = ssub.s32 1, %s4
  %s7 = scalar_select 0, %s6, %s4
  %v8 = vstv %s2
  %9 = vst [vmem:[#allocation2] sm:$0x1] %v8
  $region1: #{dropblock2d_forward.3} parent=0
    #allocation3 [shape = 'u8[16384]{0}', space=vmem, size = 0x4000, scoped, tag = 'output window, operand 0']
    #allocation4 [shape = 's32[2]{0}', space=sflag, size = 0x8, scoped, tag = 'scoped memory for dropblock2d_forward.3']
    %10 = vsyncpa [#allocation4], 0
    %s11 = scalar_lea.sflag [#allocation4], 1
    %12 = vsyncpa %s11, 0
    loop: start=0, step=1, limit=10
    $region2: #{dropblock2d_forward.3} parent=1 // loop_pre_header
      _
    $region3: #{dropblock2d_forward.3} parent=1 // loop_header
      %s14 = sphi 0, %s18
      %p15 = scmp.ge.s32.totalorder %s14, 10
      %s21 = sphi 0, %s40
      %s22 = sphi 0, %s36
      %s23 = sphi 0, %s32
      %s24 = sphi 0, %s21
      %s25 = sphi 0, %s22
      %s26 = sphi 0, %s23
      %s27 = sphi 0, %s24
      %s28 = sphi 0, %s25
      %s29 = sphi 0, %s26
      %s47 = sphi 0, %s49
      %s50 = sphi 0, %s47
      %s51 = sphi 0, %s50
      %s67 = sphi 0, %s51
      %s75 = sphi 0, %s77
      %s78 = sphi 0, %s75
      %s79 = sphi 0, %s78
      %s95 = sphi 0, %s79
      %s99 = sphi 0, %s99
      %s101 = sphi 0, %s99
      %s102 = sphi 0, %s101
      %s116 = sphi 0, %s102
      %s126 = sphi 0, %s128
      %s129 = sphi 0, %s126
      %s130 = sphi 0, %s129
      %s146 = sphi 0, %s130
    $region4: #{dropblock2d_forward.3} parent=1 // loop_header_branch
      %17 = sbr.rel (%p15) target = $region8
    $region5: #{dropblock2d_forward.3} parent=1 // loop_body
      %s19 = ssub.s32 %s14, 1
      %s20 = ssub.s32 %s14, 2
      %s30 = sadd.s32 1, %s23
      %p31 = scmp.ge.s32.totalorder %s30, 4
      %s32 = scalar_select %p31, 0, %s30
      %s33 = sadd.s32 1, %s22
      %s34 = scalar_select %p31, %s33, %s22
      %p35 = scmp.ge.s32.totalorder %s34, 1
      %s36 = scalar_select %p35, 0, %s34
      %s37 = sadd.s32 1, %s21
      %s38 = scalar_select %p35, %s37, %s21
      %p39 = scmp.ge.s32.totalorder %s38, 2
      %s40 = scalar_select %p39, 0, %s38
      %s41 = ssub.s32 %s21, %s40
      %s42 = ssub.s32 %s23, %s32
      %s43 = sor.u32 %s41, %s42
      %s44 = ssub.s32 %s22, %s36
      %s45 = sor.u32 %s43, %s44
      %p46 = scmp.eq.s32.totalorder %s45, 0
      %s48 = sadd.s32 %s47, 1
      %s49 = scalar_select %p46, %s47, %s48
      %p52 = pneg %p46
      %p53 = scmp.eq.s32.totalorder %s14, 7
      %p54 = por %p52, %p53
      %p55 = scmp.ne.s32.totalorder %s47, %s50
      %p56 = scmp.eq.s32.totalorder %s14, 0
      %p57 = por %p55, %p56
      %p58 = scmp.ne.s32.totalorder %s47, %s50
      %p59 = scmp.eq.s32.totalorder %s19, 7
      %p60 = por %p58, %p59
      %p61 = scmp.ne.s32.totalorder %s50, %s51
      %p62 = scmp.eq.s32.totalorder %s19, 0
      %p63 = por %p61, %p62
      %p64 = scmp.ne.s32.totalorder %s50, %s51
      %p65 = scmp.eq.s32.totalorder %s20, 7
      %p66 = por %p64, %p65
      %p68 = scmp.ne.s32.totalorder %s51, %s67
      %p69 = scmp.eq.s32.totalorder %s20, 0
      %p70 = por %p68, %p69
      %s71 = ssub.s32 %s21, %s40
      %s72 = ssub.s32 %s22, %s36
      %s73 = sor.u32 %s71, %s72
      %p74 = scmp.eq.s32.totalorder %s73, 0
      %s76 = sadd.s32 %s75, 1
      %s77 = scalar_select %p74, %s75, %s76
      %p80 = pneg %p74
      %p81 = scmp.eq.s32.totalorder %s14, 7
      %p82 = por %p80, %p81
      %p83 = scmp.ne.s32.totalorder %s75, %s78
      %p84 = scmp.eq.s32.totalorder %s14, 0
      %p85 = por %p83, %p84
      %p86 = scmp.ne.s32.totalorder %s75, %s78
      %p87 = scmp.eq.s32.totalorder %s19, 7
      %p88 = por %p86, %p87
      %p89 = scmp.ne.s32.totalorder %s78, %s79
      %p90 = scmp.eq.s32.totalorder %s19, 0
      %p91 = por %p89, %p90
      %p92 = scmp.ne.s32.totalorder %s78, %s79
      %p93 = scmp.eq.s32.totalorder %s20, 7
      %p94 = por %p92, %p93
      %p96 = scmp.ne.s32.totalorder %s79, %s95
      %p97 = scmp.eq.s32.totalorder %s20, 0
      %p98 = por %p96, %p97
      %s100 = sadd.s32 %s99, 1
      %p103 = scmp.eq.s32.totalorder %s14, 7
      %p104 = scmp.ne.s32.totalorder %s99, %s101
      %p105 = scmp.eq.s32.totalorder %s14, 0
      %p106 = por %p104, %p105
      %p107 = scmp.ne.s32.totalorder %s99, %s101
      %p108 = scmp.eq.s32.totalorder %s19, 7
      %p109 = por %p107, %p108
      %p110 = scmp.ne.s32.totalorder %s101, %s102
      %p111 = scmp.eq.s32.totalorder %s19, 0
      %p112 = por %p110, %p111
      %p113 = scmp.ne.s32.totalorder %s101, %s102
      %p114 = scmp.eq.s32.totalorder %s20, 7
      %p115 = por %p113, %p114
      %p117 = scmp.ne.s32.totalorder %s102, %s116
      %p118 = scmp.eq.s32.totalorder %s20, 0
      %p119 = por %p117, %p118
      %s120 = ssub.s32 %s21, %s40
      %s121 = ssub.s32 %s23, %s32
      %s122 = sor.u32 %s120, %s121
      %s123 = ssub.s32 %s22, %s36
      %s124 = sor.u32 %s122, %s123
      %p125 = scmp.eq.s32.totalorder %s124, 0
      %s127 = sadd.s32 %s126, 1
      %s128 = scalar_select %p125, %s126, %s127
      %p131 = pneg %p125
      %p132 = scmp.eq.s32.totalorder %s14, 7
      %p133 = por %p131, %p132
      %p134 = scmp.ne.s32.totalorder %s126, %s129
      %p135 = scmp.eq.s32.totalorder %s14, 0
      %p136 = por %p134, %p135
      %p137 = scmp.ne.s32.totalorder %s126, %s129
      %p138 = scmp.eq.s32.totalorder %s19, 7
      %p139 = por %p137, %p138
      %p140 = scmp.ne.s32.totalorder %s129, %s130
      %p141 = scmp.eq.s32.totalorder %s19, 0
      %p142 = por %p140, %p141
      %p143 = scmp.ne.s32.totalorder %s129, %s130
      %p144 = scmp.eq.s32.totalorder %s20, 7
      %p145 = por %p143, %p144
      %p147 = scmp.ne.s32.totalorder %s130, %s146
      %p148 = scmp.eq.s32.totalorder %s20, 0
      %p149 = por %p147, %p148
      %p150 = scmp.le.s32.totalorder 1, %s14
      %p151 = scmp.lt.s32.totalorder %s14, 9
      %p152 = pnand %p150, %p151
      %p153 = pneg %p152
      // Predicated region
      $region9: #{dropblock2d_forward.3} parent=5 // pred_check
        _
      $region10: #{dropblock2d_forward.3} parent=5 // pred_check_branch
        %155 = sbr.rel (%p152) target = $region12
      $region11: #{dropblock2d_forward.3} parent=5 // pred_region
        %s156 = ssub.s32 %s14, 1
        // Predicated region
        $region13: #{dropblock2d_forward.3} parent=11 // pred_check
          %p157 = pneg %p112
        $region14: #{dropblock2d_forward.3} parent=11 // pred_check_branch
          %159 = sbr.rel (%p157) target = $region16
        $region15: #{dropblock2d_forward.3} parent=11 // pred_region
          _
        $region16: #{dropblock2d_forward.3} parent=11 // pred_fallthru
          _
      $region12: #{dropblock2d_forward.3} parent=5 // pred_fallthru
        _
      %p160 = scmp.lt.s32.totalorder %s14, 8
      // Predicated region
      $region17: #{dropblock2d_forward.3} parent=5 // pred_check
        %p161 = pneg %p160
      $region18: #{dropblock2d_forward.3} parent=5 // pred_check_branch
        %163 = sbr.rel (%p161) target = $region20
      $region19: #{dropblock2d_forward.3} parent=5 // pred_region
        // Predicated region
        $region21: #{dropblock2d_forward.3} parent=19 // pred_check
          %p164 = pneg %p57
        $region22: #{dropblock2d_forward.3} parent=19 // pred_check_branch
          %166 = sbr.rel (%p164) target = $region24
        $region23: #{dropblock2d_forward.3} parent=19 // pred_region
          %s167 = smul.u32 2, %s22
          %p168 = scmp.lt.s32.totalorder %s21, 1
          %s169 = scalar_select %p168, %s21, 1
          %p170 = scmp.lt.s32.totalorder %s23, 3
          %s171 = scalar_select %p170, %s23, 3
          %p172 = scmp.lt.s32.totalorder %s167, 1
          %s173 = scalar_select %p172, %s167, 1
          %s174 = smul.addr %s171, 2
          %s175 = sadd.s32 %s173, %s174
          %s176 = smul.addr %s169, 8
          %s177 = sadd.s32 %s175, %s176
          %s178 = smul.addr %s177, 8
          %s179 = scalar_lea.vmem %s0, %s178
          %s180 = smul.u32 2, %s22
        $region24: #{dropblock2d_forward.3} parent=19 // pred_fallthru
          _
        // Predicated region
        $region25: #{dropblock2d_forward.3} parent=19 // pred_check
          %p181 = pneg %p85
        $region26: #{dropblock2d_forward.3} parent=19 // pred_check_branch
          %183 = sbr.rel (%p181) target = $region28
        $region27: #{dropblock2d_forward.3} parent=19 // pred_region
          %s184 = smul.u32 2, %s22
          %p185 = scmp.lt.s32.totalorder %s21, 1
          %s186 = scalar_select %p185, %s21, 1
          %p187 = scmp.lt.s32.totalorder %s184, 1
          %s188 = scalar_select %p187, %s184, 1
          %s189 = smul.addr %s186, 2
          %s190 = sadd.s32 %s188, %s189
          %s191 = smul.addr %s190, 8
          %s192 = scalar_lea.vmem %s1, %s191
          %s193 = smul.u32 2, %s22
        $region28: #{dropblock2d_forward.3} parent=19 // pred_fallthru
          _
      $region20: #{dropblock2d_forward.3} parent=5 // pred_fallthru
        _
      %p194 = scmp.le.s32.totalorder 1, %s14
      %p195 = scmp.lt.s32.totalorder %s14, 9
      %p196 = pnand %p194, %p195
      %p197 = pneg %p196
      // Predicated region
      $region29: #{dropblock2d_forward.3} parent=5 // pred_check
        _
      $region30: #{dropblock2d_forward.3} parent=5 // pred_check_branch
        %199 = sbr.rel (%p196) target = $region32
      $region31: #{dropblock2d_forward.3} parent=5 // pred_region
        %s200 = ssub.s32 %s14, 1
        %s201 = smul.u32 2, %s25
        %p202 = scmp.lt.s32.totalorder %s24, 1
        %s203 = scalar_select %p202, %s24, 1
        %p204 = scmp.lt.s32.totalorder %s26, 3
        %s205 = scalar_select %p204, %s26, 3
        %p206 = scmp.lt.s32.totalorder %s201, 1
        %s207 = scalar_select %p206, %s201, 1
        %s208 = smul.addr %s205, 2
        %s209 = sadd.s32 %s207, %s208
        %s210 = smul.addr %s203, 8
        %s211 = sadd.s32 %s209, %s210
        %s212 = smul.addr %s211, 8
        %s213 = scalar_lea.vmem %s0, %s212
        %p214 = pneg %p63
        %p215 = pneg %p60
        %s216 = smul.u32 2, %s25
        %p217 = scmp.lt.s32.totalorder %s24, 1
        %s218 = scalar_select %p217, %s24, 1
        %p219 = scmp.lt.s32.totalorder %s216, 1
        %s220 = scalar_select %p219, %s216, 1
        %s221 = smul.addr %s218, 2
        %s222 = sadd.s32 %s220, %s221
        %s223 = smul.addr %s222, 8
        %s224 = scalar_lea.vmem %s1, %s223
        %p225 = pneg %p91
        %p226 = pneg %p88
        %p227 = pneg %p112
        %p228 = pneg %p109
        %p229 = pneg %p142
        %p230 = pneg %p139
        %s231 = sand.u32 %s129, 1
        %s232 = scalar_lea.sflag [#allocation4], %s231
        %s233 = sand.u32 %s129, 1
        %s234 = smul.addr %s233, 16
        %s235 = scalar_lea.vmem [#allocation3], %s234
        %s236 = smul.u32 2, %s25
        %p237 = scmp.lt.s32.totalorder %s24, 1
        %s238 = scalar_select %p237, %s24, 1
        %p239 = scmp.lt.s32.totalorder %s26, 3
        %s240 = scalar_select %p239, %s26, 3
        %p241 = scmp.lt.s32.totalorder %s236, 1
        %s242 = scalar_select %p241, %s236, 1
        %s243 = smul.addr %s240, 2
        %s244 = sadd.s32 %s242, %s243
        %s245 = smul.addr %s238, 8
        %s246 = sadd.s32 %s244, %s245
        %s247 = smul.addr %s246, 8
        %s248 = scalar_lea.vmem %s0, %s247
        %s249 = smul.u32 2, %s25
        %s250 = smul.u32 2, %s25
        %p251 = scmp.lt.s32.totalorder %s24, 1
        %s252 = scalar_select %p251, %s24, 1
        %p253 = scmp.lt.s32.totalorder %s250, 1
        %s254 = scalar_select %p253, %s250, 1
        %s255 = smul.addr %s252, 2
        %s256 = sadd.s32 %s254, %s255
        %s257 = smul.addr %s256, 8
        %s258 = scalar_lea.vmem %s1, %s257
        %s259 = smul.u32 2, %s25
        %s260 = smul.u32 2, %s25
        %v261 = vld [vmem:[%s248] sm:$0xff]
        %v262 = vld [vmem:[%s248 + $0x8] sm:$0xff]
        %v263 = vld [vmem:[%s258] sm:$0xff]
        %v264 = vld [vmem:[%s258 + $0x8] sm:$0xff]
        %v265 = vld [vmem:[#allocation2] sm:$0x1]
        %s266 = vtos %v265
        %v267 = vstv %s266
        %v268 = vmul.f32 %v263, %v267
        %v269 = vmul.f32 %v264, %v267
        %v270 = vmul.f32 %v261, %v268
        %v271 = vmul.f32 %v262, %v269
        %vm272 = vcmask 130048
        %273 = vst.msk [vmem:[%s235] sm:$0xff] %vm272, %v270
        %274 = vst.msk [vmem:[%s235 + $0x8] sm:$0xff] %vm272, %v271
        %s275 = sand.u32 %s129, 1
        %s276 = scalar_lea.sflag [#allocation4], %s275
        %s277 = sand.u32 %s129, 1
        %s278 = smul.addr %s277, 16
        %s279 = scalar_lea.vmem [#allocation3], %s278
        // Predicated region
        $region33: #{dropblock2d_forward.3} parent=31 // pred_check
          %p280 = pneg %p139
        $region34: #{dropblock2d_forward.3} parent=31 // pred_check_branch
          %282 = sbr.rel (%p280) target = $region36
        $region35: #{dropblock2d_forward.3} parent=31 // pred_region
          %s283 = smul.u32 2, %s25
          %s285 = ssub.s32 256, 256
          %286 = vsyncadd %s276, %s285
          %s287 = smul.addr %s26, 2
          %s288 = sadd.s32 %s283, %s287
          %s289 = smul.addr %s24, 8
          %s290 = sadd.s32 %s288, %s289
          %s291 = smul.addr %s290, 128
          %s292 = scalar_lea.hbm %s3, %s291
          %s293 = sshll.u32 %s279, 4
          %s294 = int_to_ptr.vmem [resolvable:$true] %s293
          %299 = dma.vmem_to_hbm [thread:$0]  %s294, 256, %s292, %s276, 128, 128, 8
        $region36: #{dropblock2d_forward.3} parent=31 // pred_fallthru
          _
      $region32: #{dropblock2d_forward.3} parent=5 // pred_fallthru
        _
      %p300 = scmp.le.s32.totalorder 2, %s14
      // Predicated region
      $region37: #{dropblock2d_forward.3} parent=5 // pred_check
        %p301 = pneg %p300
      $region38: #{dropblock2d_forward.3} parent=5 // pred_check_branch
        %303 = sbr.rel (%p301) target = $region40
      $region39: #{dropblock2d_forward.3} parent=5 // pred_region
        %s304 = ssub.s32 %s14, 2
        // Predicated region
        $region41: #{dropblock2d_forward.3} parent=39 // pred_check
          %p305 = pneg %p145
        $region42: #{dropblock2d_forward.3} parent=39 // pred_check_branch
          %307 = sbr.rel (%p305) target = $region44
        $region43: #{dropblock2d_forward.3} parent=39 // pred_region
          %s308 = sand.u32 %s130, 1
          %s309 = scalar_lea.sflag [#allocation4], %s308
          %s310 = sand.u32 %s130, 1
          %s311 = smul.addr %s310, 16
          %s312 = scalar_lea.vmem [#allocation3], %s311
          %313 = dma.done %s309, 256
        $region44: #{dropblock2d_forward.3} parent=39 // pred_fallthru
          _
      $region40: #{dropblock2d_forward.3} parent=5 // pred_fallthru
        _
    $region6: #{dropblock2d_forward.3} parent=1 // loop_footer
      %s18 = sadd.s32 1, %s14
    $region7: #{dropblock2d_forward.3} parent=1 // loop_footer_branch
      %13 = sbr.rel target = $region3
    $region8: #{dropblock2d_forward.3} parent=1 // loop_exit
      _
    %314 = vsyncpa [#allocation4], 1
    %s315 = scalar_lea.sflag [#allocation4], 1
    %316 = vsyncpa %s315, 1

</llo_original>
